<compile_context>
chip_gen: v7x
topology: tpu7x:2x2x1
jax: 0.10.0
libtpu: 0.0.40
codegen_flags: <defaults>
</compile_context>

<pallas_src>
import jax
import jax.numpy as jnp
from jax import lax
from jax.experimental import pallas as pl
from jax.experimental.pallas import tpu as pltpu


# ---------------------------------------------------------------------------
# Tunables
# ---------------------------------------------------------------------------
_SMALL_PATH_BYTES = 1 << 20   # whole-problem-in-VMEM fast path below this size
_VPU_MAX_K = 32               # K <= 32: MXU is fill/drain dominated, use VPU
# 256-wide tiles match the v6e/v7x 2x256x256 MXU; on v5e (4x128x128) they are
# still correct and the double-buffered footprint (~3 MiB) stays well inside
# the 16 MiB scoped default, so one set of constants is used everywhere.
_TM, _TN, _TK = 256, 256, 512


def _round_up(x, m):
    return ((x + m - 1) // m) * m


# ---------------------------------------------------------------------------
# Kernels
# ---------------------------------------------------------------------------
def _widthfc_vpu_kernel(x_ref, w_ref, b_ref, o_ref):
    """Small-K path (K <= 32): statically unrolled VPU outer-product sum.

    x: (B, K), w: (K, H), b: (1, H) -> o: (B, H).  For the module default
    (K == 1) this is a single broadcast multiply + bias, no MXU involved.
    """
    x = x_ref[...].astype(jnp.float32)
    w = w_ref[...].astype(jnp.float32)
    y = b_ref[...].astype(jnp.float32)            # (1, H), broadcasts over B
    for k in range(x.shape[1]):                   # static unroll, K <= 32
        y = y + x[:, k:k + 1] * w[k:k + 1, :]
    o_ref[...] = y.astype(o_ref.dtype)


def _widthfc_mxu_small_kernel(x_ref, w_ref, b_ref, o_ref):
    """Grid-less MXU path for problems that comfortably fit VMEM.

    x: (B, K), w: (K, H) (pre-transposed in the wrapper), b: (1, H).
    """
    y = jnp.dot(x_ref[...], w_ref[...], preferred_element_type=jnp.float32)
    o_ref[...] = (y + b_ref[...].astype(jnp.float32)).astype(o_ref.dtype)


def _widthfc_mxu_tiled_kernel(x_ref, w_ref, b_ref, o_ref, acc_ref):
    """Tiled production path: y = x @ W_t + b with a resident f32 accumulator.

    Grid = (M tiles, N tiles, K tiles); K is the last ("arbitrary") axis so the
    output tile stays resident while K streams.  Bias add + cast happen only
    on the final K step, keeping the inner loop MXU-only.
    """
    k = pl.program_id(2)

    @pl.when(k == 0)
    def _():
        acc_ref[...] = jnp.zeros_like(acc_ref)

    acc_ref[...] += jnp.dot(x_ref[...], w_ref[...],
                            preferred_element_type=jnp.float32)

    @pl.when(k == pl.num_programs(2) - 1)
    def _():
        o_ref[...] = (acc_ref[...] + b_ref[...].astype(jnp.float32)
                      ).astype(o_ref.dtype)


# ---------------------------------------------------------------------------
# Wrapper (matches torch.nn.Linear forward: y = x @ W.T + b)
# ---------------------------------------------------------------------------
def widthfc_forward(x, weight, bias, *, force_tiled=False):
    """x: (B, D_in), weight: (H, D_in), bias: (H,) -> (B, H)."""
    B, D_in = x.shape
    H = weight.shape[0]

    # One-time wrapper transpose to (K, N): amortized over all tiles/calls,
    # keeps the weight tile lane-dense along N and avoids any in-kernel XLU
    # transpose of the RHS.
    w_t = weight.T                       # (D_in, H)
    b2 = bias.reshape(1, H)

    total_bytes = (x.size + w_t.size + b2.size + B * H) * x.dtype.itemsize
    small = (not force_tiled) and (total_bytes <= _SMALL_PATH_BYTES)

    if small:
        vmem = pl.BlockSpec(memory_space=pltpu.MemorySpace.VMEM)
        kernel = (_widthfc_vpu_kernel if D_in <= _VPU_MAX_K
                  else _widthfc_mxu_small_kernel)
        return pl.pallas_call(
            kernel,
            out_shape=jax.ShapeDtypeStruct((B, H), x.dtype),
            in_specs=[vmem, vmem, vmem],
            out_specs=vmem,
        )(x, w_t, b2)

    # ---------------- tiled, pipelined production path ----------------
    tm = _TM if B >= _TM else _round_up(B, 8)
    tn = _TN if H >= _TN else _round_up(H, 128)      # lane-dense output tiles
    tk = _TK if D_in >= _TK else _round_up(D_in, 128)

    Mp, Np, Kp = _round_up(B, tm), _round_up(H, tn), _round_up(D_in, tk)

    xp = x if (Mp == B and Kp == D_in) else jnp.pad(
        x, ((0, Mp - B), (0, Kp - D_in)))
    wp = w_t if (Kp == D_in and Np == H) else jnp.pad(
        w_t, ((0, Kp - D_in), (0, Np - H)))
    bp = b2 if Np == H else jnp.pad(b2, ((0, 0), (0, Np - H)))

    grid = (Mp // tm, Np // tn, Kp // tk)

    isz = x.dtype.itemsize
    # Double-buffered input tiles + bias, resident f32 acc, double-buffered out.
    footprint = (2 * (tm * tk + tk * tn) * isz
                 + 2 * tn * bp.dtype.itemsize
                 + tm * tn * 4
                 + 2 * tm * tn * isz)
    vmem_limit = int(min(2 * footprint + (4 << 20), 64 << 20))  # v7x physical cap

    out = pl.pallas_call(
        _widthfc_mxu_tiled_kernel,
        out_shape=jax.ShapeDtypeStruct((Mp, Np), x.dtype),
        grid_spec=pltpu.PrefetchScalarGridSpec(
            num_scalar_prefetch=0,
            grid=grid,
            in_specs=[
                pl.BlockSpec((tm, tk), lambda i, j, k: (i, k)),   # x tile
                pl.BlockSpec((tk, tn), lambda i, j, k: (k, j)),   # W_t tile
                pl.BlockSpec((1, tn), lambda i, j, k: (0, j)),    # bias tile
            ],
            out_specs=pl.BlockSpec((tm, tn), lambda i, j, k: (i, j)),
            scratch_shapes=[pltpu.VMEM((tm, tn), jnp.float32)],
        ),
        compiler_params=pltpu.CompilerParams(
            dimension_semantics=("parallel", "parallel", "arbitrary"),
            vmem_limit_bytes=vmem_limit,
        ),
    )(xp, wp, bp)

    if Mp != B or Np != H:
        out = out[:B, :H]
    return out


# ---------------------------------------------------------------------------
# Self-test
# ---------------------------------------------------------------------------
if __name__ == "__main__":
    key = jax.random.PRNGKey(0)
    ks = jax.random.split(key, 9)

    def make(kx, kw, kb, B, D_in, H, dtype=jnp.float32):
        bound = 1.0 / (D_in ** 0.5)
        w = jax.random.uniform(kw, (H, D_in), minval=-bound, maxval=bound,
                               dtype=dtype)
        b = jax.random.uniform(kb, (H,), minval=-bound, maxval=bound,
                               dtype=dtype)
        x = jax.random.normal(kx, (B, D_in), dtype=dtype)
        return x, w, b

    def ref_fn(x, w, b):
        return jnp.dot(x, w.T, precision=lax.Precision.HIGHEST) + b

    # 1) Default module shape: input_dim=1, hidden_size=16, batch=8 (VPU path).
    x, w, b = make(ks[0], ks[1], ks[2], 8, 1, 16)
    out = jax.block_until_ready(widthfc_forward(x, w, b))
    assert out.shape == (8, 16)
    assert jnp.allclose(out, ref_fn(x, w, b), atol=1e-5, rtol=1e-5)

    # 2) Small D_in > 1 (K <= 32): still the VPU path (no MXU fill/drain).
    x, w, b = make(ks[3], ks[4], ks[5], 16, 8, 32)
    out = jax.block_until_ready(widthfc_forward(x, w, b))
    assert out.shape == (16, 32)
    assert jnp.allclose(out, ref_fn(x, w, b), atol=1e-5, rtol=1e-5)

    # 3) Tiled production path (non-divisible shapes -> padding, pipelined
    #    grid, f32 accumulator, bias in finalize).
    x, w, b = make(ks[6], ks[7], ks[8], 130, 200, 72)
    out = jax.block_until_ready(widthfc_forward(x, w, b, force_tiled=True))
    assert out.shape == (130, 72)
    assert jnp.allclose(out, ref_fn(x, w, b), atol=1e-3, rtol=1e-3)

    print("KERNEL_OK")
</pallas_src>

<mosaic_0001>
module attributes {stable_mosaic.version = 11 : i64} {
  func.func @_widthfc_vpu_kernel(%arg0: memref<8x1xf32, #tpu.memory_space<vmem>>, %arg1: memref<1x16xf32, #tpu.memory_space<vmem>>, %arg2: memref<1x16xf32, #tpu.memory_space<vmem>>, %arg3: memref<8x16xf32, #tpu.memory_space<vmem>>) attributes {dimension_semantics = [], scalar_prefetch = 0 : i64, scratch_operands = 0 : i64, tpu.core_type = #tpu.core_type<tc>} {
    %c0 = arith.constant 0 : index
    %c0_0 = arith.constant 0 : index
    %0 = vector.load %arg0[%c0, %c0_0] : memref<8x1xf32, #tpu.memory_space<vmem>>, vector<8x1xf32>
    %c0_1 = arith.constant 0 : index
    %c0_2 = arith.constant 0 : index
    %1 = vector.load %arg1[%c0_1, %c0_2] : memref<1x16xf32, #tpu.memory_space<vmem>>, vector<1x16xf32>
    %c0_3 = arith.constant 0 : index
    %c0_4 = arith.constant 0 : index
    %2 = vector.load %arg2[%c0_3, %c0_4] : memref<1x16xf32, #tpu.memory_space<vmem>>, vector<1x16xf32>
    %3 = vector.broadcast %0 : vector<8x1xf32> to vector<8x16xf32>
    %4 = vector.broadcast %1 : vector<1x16xf32> to vector<8x16xf32>
    %5 = arith.mulf %3, %4 : vector<8x16xf32>
    %6 = vector.broadcast %2 : vector<1x16xf32> to vector<8x16xf32>
    %7 = arith.addf %6, %5 : vector<8x16xf32>
    %c0_5 = arith.constant 0 : index
    %c0_6 = arith.constant 0 : index
    %8 = vector.load %arg3[%c0_5, %c0_6] : memref<8x16xf32, #tpu.memory_space<vmem>>, vector<8x16xf32>
    tpu.vector_store %arg3[%c0_5, %c0_6], %7 {strides = array<i32>} : memref<8x16xf32, #tpu.memory_space<vmem>>, vector<8x16xf32>,
    return
  }
}

</mosaic_0001>

<llo_original>
// kernel: tpu_custom_call.1
$region0: #{tpu_custom_call.1}
  #allocation0 [shape = 'u32[]', space=smem, size = 0x4, offset = 0x4, fixed_abs, tag = 'smem constant byte address 0x4 - core index']
  #allocation1 [shape = 'u32[144,128]{1,0:T(1,128)}', space=vmem, size = 0x12000, scoped, tag = 'internal scratch']
  %s0 = inlined_call_operand.vmem [shape: f32[8,1], index: 0, kind: input, shape index: {}]
  %s1 = inlined_call_operand.vmem [shape: f32[1,16], index: 1, kind: input, shape index: {}]
  %s2 = inlined_call_operand.vmem [shape: f32[1,16], index: 2, kind: input, shape index: {}]
  %s3 = inlined_call_operand.hbm [shape: f32[8,16], index: 3, kind: output, shape index: {}]
  %s4 = sld [smem:[#allocation0]]
  $region22: #{tpu_custom_call.1} parent=0
    _
  %s6 = ssub.s32 1, %s4
  %s7 = scalar_select 0, %s6, %s4
  $region1: #{tpu_custom_call.1} parent=0
    #allocation2 [shape = 'u8[4096]{0}', space=vmem, size = 0x1000, scoped, tag = 'output window, operand 0, single buffered']
    #allocation3 [shape = 's32[1]{0}', space=sflag, size = 0x4, scoped, tag = 'scoped memory for tpu_custom_call.1']
    %8 = vsyncpa [#allocation3], 0
    // Predicated region
    $region2: #{tpu_custom_call.1} parent=1 // pred_check
      _
    $region3: #{tpu_custom_call.1} parent=1 // pred_check_branch
      %10 = sbr.rel (0) target = $region5
    $region4: #{tpu_custom_call.1} parent=1 // pred_region
      _
    $region5: #{tpu_custom_call.1} parent=1 // pred_fallthru
      _
    // Predicated region
    $region6: #{tpu_custom_call.1} parent=1 // pred_check
      _
    $region7: #{tpu_custom_call.1} parent=1 // pred_check_branch
      %12 = sbr.rel (0) target = $region9
    $region8: #{tpu_custom_call.1} parent=1 // pred_region
      _
    $region9: #{tpu_custom_call.1} parent=1 // pred_fallthru
      _
    // Predicated region
    $region10: #{tpu_custom_call.1} parent=1 // pred_check
      _
    $region11: #{tpu_custom_call.1} parent=1 // pred_check_branch
      %14 = sbr.rel (0) target = $region13
    $region12: #{tpu_custom_call.1} parent=1 // pred_region
      _
    $region13: #{tpu_custom_call.1} parent=1 // pred_fallthru
      _
    %v15 = vld [vmem:[%s0] sm:$0xff]
    %v16 = vld [vmem:[%s1] sm:$0x1]
    %v17 = vld [vmem:[%s2] sm:$0x1]
    %19 = vset.pattern.permute.xlu0 0
    %20 = vperm.xlu0 %19, %v15
    %v21 = vpop.permute.xlu0 %20
    %v24 = vlaneseq
    %v25 = vshrl.u32 %v24, 7
    %v26 = vsub.s32 0, %v25
    %v27 = vrot.slane %v16, %v26
    %v29 = vmul.f32 %v21, %v27
    %v31 = vlaneseq
    %v32 = vshrl.u32 %v31, 7
    %v33 = vsub.s32 0, %v32
    %v34 = vrot.slane %v17, %v33
    %v36 = vadd.f32 %v34, %v29
    %vm37 = vcmask 130048
    %38 = vst.msk [vmem:[#allocation2] sm:$0xff] %vm37, %v36
    // Predicated region
    $region14: #{tpu_custom_call.1} parent=1 // pred_check
      _
    $region15: #{tpu_custom_call.1} parent=1 // pred_check_branch
      %40 = sbr.rel (0) target = $region17
    $region16: #{tpu_custom_call.1} parent=1 // pred_region
      %s42 = ssub.s32 128, 128
      %43 = vsyncadd [#allocation3], %s42
      %s45 = sshll.u32 [#allocation2], 4
      %s46 = int_to_ptr.vmem [resolvable:$true] %s45
      %48 = dma.vmem_to_hbm [thread:$0]  %s46, 128, %s3, [#allocation3]
    $region17: #{tpu_custom_call.1} parent=1 // pred_fallthru
      _
    // Predicated region
    $region18: #{tpu_custom_call.1} parent=1 // pred_check
      _
    $region19: #{tpu_custom_call.1} parent=1 // pred_check_branch
      %50 = sbr.rel (0) target = $region21
    $region20: #{tpu_custom_call.1} parent=1 // pred_region
      %51 = dma.done [#allocation3], 128
    $region21: #{tpu_custom_call.1} parent=1 // pred_fallthru
      _
    %52 = vsyncpa [#allocation3], 1

</llo_original>
